<compile_context>
chip_gen: v7x
topology: tpu7x:2x2x1
jax: 0.10.0
libtpu: 0.0.40
codegen_flags: <defaults>
</compile_context>

<pallas_src>
import functools

import jax
import jax.numpy as jnp
from jax.experimental import pallas as pl
from jax.experimental.pallas import tpu as pltpu


# ----------------------------------------------------------------------------
# Wrapper-side weight preparation: fold the causal dilated conv into a dense
# (W*Cin, W*Cout) matrix (time-major, channel-minor flattening on both sides).
# ----------------------------------------------------------------------------
def conv_to_dense(w_oihw, dil, W):
    """Torch OIHW conv weight (Cout, Cin, 1, K) -> (W*Cin, W*Cout) dense matrix
    implementing the causal (left-pad + chomp) dilated conv along time."""
    Cout, Cin, _, K = w_oihw.shape
    pad = (K - 1) * dil
    taps = w_oihw[:, :, 0, :]                      # (Cout, Cin, K)
    big = jnp.zeros((W, Cin, W, Cout), jnp.float32)
    for k in range(K):
        off = pad - k * dil                        # out[t] uses x[t - off]
        S = jnp.eye(W, W, off, dtype=jnp.float32)  # S[t_in, t] = 1 iff t = t_in + off
        big = big + jnp.einsum("it,oc->icto", S, taps[:, :, k])
    return big.reshape(W * Cin, W * Cout)


def bias_to_dense(b, W):
    """(Cout,) -> (1, W*Cout) with b repeated per time step (t-major, c-minor)."""
    return jnp.tile(b, W)[None, :]


# ----------------------------------------------------------------------------
# Fused Pallas kernel: all GaussBlack layers on one row tile.
# ----------------------------------------------------------------------------
def _make_fused_net_kernel(num_layers):
    def kernel(x_ref, *rest):
        out_ref = rest[-1]
        wrefs = rest[:-1]
        a = x_ref[...]                                     # (TILE_R, W*Cin)
        for i in range(num_layers):                        # unrolled (static)
            w1, b1, w2, b2, wd, bd = wrefs[6 * i: 6 * i + 6]
            h = jnp.tanh(jnp.dot(a, w1[...], preferred_element_type=jnp.float32)
                         + b1[...])
            h = jnp.tanh(jnp.dot(h, w2[...], preferred_element_type=jnp.float32)
                         + b2[...])
            res = jnp.dot(a, wd[...], preferred_element_type=jnp.float32) + bd[...]
            a = jnp.maximum(h + res, 0.0)                  # ReLU(out + res)
        out_ref[...] = a
    return kernel


def gauss_net_fused(x, dense_weights, *, tile_r=512):
    """x: (R, W*Cin) f32.  dense_weights: flat [W1,b1,W2,b2,Wd,bd] per layer."""
    R, Fin = x.shape
    Fout = dense_weights[-1].shape[1]          # last layer's W*Cout
    num_layers = len(dense_weights) // 6

    if R <= tile_r:
        TILE_R, Rp, xg = R, R, x
    else:
        TILE_R = tile_r                        # multiple of 8
        rem = (-R) % TILE_R
        xg = jnp.pad(x, ((0, rem), (0, 0))) if rem else x
        Rp = R + rem

    in_specs = [pl.BlockSpec((TILE_R, Fin), lambda r: (r, 0))]
    for wgt in dense_weights:                  # weights: full-array resident blocks
        in_specs.append(pl.BlockSpec(wgt.shape, lambda r: (0, 0)))

    out = pl.pallas_call(
        _make_fused_net_kernel(num_layers),
        out_shape=jax.ShapeDtypeStruct((Rp, Fout), jnp.float32),
        grid=(Rp // TILE_R,),
        in_specs=in_specs,
        out_specs=pl.BlockSpec((TILE_R, Fout), lambda r: (r, 0)),
        compiler_params=pltpu.CompilerParams(dimension_semantics=("parallel",)),
    )(xg, *dense_weights)
    return out[:R] if Rp != R else out


# ----------------------------------------------------------------------------
# Pallas kernel: final Linear layer (tiled matmul + bias, F-reduction last).
# ----------------------------------------------------------------------------
def _linear_kernel(y_ref, w_ref, b_ref, o_ref, acc_ref):
    @pl.when(pl.program_id(1) == 0)
    def _():
        acc_ref[...] = jnp.zeros_like(acc_ref)
    acc_ref[...] += jnp.dot(y_ref[...], w_ref[...],
                            preferred_element_type=jnp.float32)

    @pl.when(pl.program_id(1) == pl.num_programs(1) - 1)
    def _():
        o_ref[...] = acc_ref[...] + b_ref[...]


def linear_pallas(y, w, b, *, tn=256, tf=1024):
    """y: (N, F), w: (F, O), b: (1, O) -> (N, O)"""
    N, F = y.shape
    O = w.shape[1]
    TN = N if N <= tn else tn                  # tn multiple of 8
    TF = F if F <= tf else tf                  # tf multiple of 128
    pn = (-N) % TN
    pf = (-F) % TF
    if pn or pf:
        y = jnp.pad(y, ((0, pn), (0, pf)))
    if pf:
        w = jnp.pad(w, ((0, pf), (0, 0)))
    Np, Fp = N + pn, F + pf

    out = pl.pallas_call(
        _linear_kernel,
        out_shape=jax.ShapeDtypeStruct((Np, O), jnp.float32),
        grid=(Np // TN, Fp // TF),
        in_specs=[
            pl.BlockSpec((TN, TF), lambda i, k: (i, k)),
            pl.BlockSpec((TF, O), lambda i, k: (k, 0)),
            pl.BlockSpec((1, O), lambda i, k: (0, 0)),
        ],
        out_specs=pl.BlockSpec((TN, O), lambda i, k: (i, 0)),
        scratch_shapes=[pltpu.VMEM((TN, O), jnp.float32)],
        compiler_params=pltpu.CompilerParams(
            dimension_semantics=("parallel", "arbitrary")),
    )(y, w, b)
    return out[:N]


# ----------------------------------------------------------------------------
# Full GTCN forward (glue around the Pallas kernels)
# ----------------------------------------------------------------------------
def gtcn_forward(inputs, params, *, num_channels, kernel_size, output_size):
    B, d1, d2, d3 = inputs.shape
    Hn, Wn, Cin0 = d1, d2, d3

    # torch: inputs.reshape(B, d3, d1, d2)  (raw memory reinterpretation -> NCHW)
    x_nchw = jnp.reshape(inputs, (B, d3, d1, d2))
    # single layout decision: rows = B*H, features = (time, channel) lane-dense
    x = jnp.transpose(x_nchw, (0, 2, 3, 1)).reshape(B * Hn, Wn * Cin0)

    # Fold each layer's convs into dense (W*Cin, W*Cout) matrices (tiny here).
    dense = []
    for i, lp in enumerate(params["layers"]):
        dil = 2 ** i
        dense += [
            conv_to_dense(lp["w1"], dil, Wn), bias_to_dense(lp["b1"], Wn),
            conv_to_dense(lp["w2"], dil, Wn), bias_to_dense(lp["b2"], Wn),
            conv_to_dense(lp["wd"], 1, Wn),  bias_to_dense(lp["bd"], Wn),
        ]

    y = gauss_net_fused(x, dense)              # (B*H, W*C_last)

    Cl = num_channels[-1]
    # back to NCHW, then torch's raw (B, H, C*W) reinterpretation for the linear
    y_nchw = jnp.transpose(y.reshape(B, Hn, Wn, Cl), (0, 3, 1, 2))
    y2 = jnp.reshape(y_nchw, (B * Hn, Cl * Wn))

    # TODO(synk): matmul operands could be cast to bf16 on v6e/v7x; kept f32 for
    # v5e compatibility and bit-accuracy of the verification harness.
    out = linear_pallas(y2, params["lin_w"].T, params["lin_b"].reshape(1, -1))
    return out.reshape(B, Hn, output_size)


# ----------------------------------------------------------------------------
# Pure-JAX reference (emulates the PyTorch module exactly) for verification
# ----------------------------------------------------------------------------
def _conv2d_nchw(x, w, b, dilation, pad_w):
    out = jax.lax.conv_general_dilated(
        x, w, window_strides=(1, 1),
        padding=((0, 0), (pad_w, pad_w)),
        rhs_dilation=(1, dilation),
        dimension_numbers=("NCHW", "OIHW", "NCHW"),
    )
    return out + b[None, :, None, None]


def reference_forward(inputs, params, *, kernel_size, output_size):
    B, d1, d2, d3 = inputs.shape
    K = kernel_size
    x = jnp.reshape(inputs, (B, d3, d1, d2))
    for i, lp in enumerate(params["layers"]):
        dil = 2 ** i
        pad = (K - 1) * dil
        o = _conv2d_nchw(x, lp["w1"], lp["b1"], dil, pad)
        o = o[:, :, :, :-pad] if pad > 0 else o
        o = jnp.tanh(o)
        o = _conv2d_nchw(o, lp["w2"], lp["b2"], dil, pad)
        o = o[:, :, :, :-pad] if pad > 0 else o
        o = jnp.tanh(o)
        res = _conv2d_nchw(x, lp["wd"], lp["bd"], 1, 0)
        x = jax.nn.relu(o + res)
    Cl, H, W = x.shape[1], x.shape[2], x.shape[3]
    y1 = jnp.reshape(x, (B, H, Cl * W))
    return y1 @ params["lin_w"].T + params["lin_b"]


# ----------------------------------------------------------------------------
# Deterministic parameter initialization (weight_norm reparam folded in)
# ----------------------------------------------------------------------------
def init_params(key, input_size, num_channels, kernel_size, input_timesteps, output_size):
    params = {"layers": []}
    K = kernel_size

    def weight_norm(v, g):
        nrm = jnp.sqrt(jnp.sum(v * v, axis=(1, 2, 3), keepdims=True))
        return g[:, None, None, None] * v / nrm

    for i, Cout in enumerate(num_channels):
        Cin = input_size if i == 0 else num_channels[i - 1]
        key, *ks = jax.random.split(key, 9)
        v1 = jax.random.normal(ks[0], (Cout, Cin, 1, K), jnp.float32) * 0.1
        g1 = jax.random.uniform(ks[1], (Cout,), jnp.float32, minval=0.5, maxval=1.5)
        b1 = jax.random.normal(ks[2], (Cout,), jnp.float32) * 0.1
        v2 = jax.random.normal(ks[3], (Cout, Cout, 1, K), jnp.float32) * 0.1
        g2 = jax.random.uniform(ks[4], (Cout,), jnp.float32, minval=0.5, maxval=1.5)
        b2 = jax.random.normal(ks[5], (Cout,), jnp.float32) * 0.1
        wd = jax.random.normal(ks[6], (Cout, Cin, 1, 1), jnp.float32) * 0.1
        bd = jax.random.normal(ks[7], (Cout,), jnp.float32) * 0.1
        params["layers"].append(dict(
            w1=weight_norm(v1, g1), b1=b1,
            w2=weight_norm(v2, g2), b2=b2,
            wd=wd, bd=bd,
        ))
    key, k1, k2 = jax.random.split(key, 3)
    Fin = num_channels[-1] * input_timesteps
    params["lin_w"] = jax.random.normal(k1, (output_size, Fin), jnp.float32) * 0.05
    params["lin_b"] = jax.random.normal(k2, (output_size,), jnp.float32) * 0.05
    return params


if __name__ == "__main__":
    # Small shapes consistent with the module:
    # inputs: (B, d1=H, d2=input_timesteps, d3=input_size)
    B = 2
    H = 4
    input_timesteps = 8
    input_size = 4
    num_channels = [8, 8]
    kernel_size = 3
    output_size = 6
    dropout = 0.0  # Dropout is identity in eval mode

    # g_kernel: stored as a frozen parameter in the PyTorch module but never
    # used in forward(); defined here only for fidelity.
    g_kernel = jnp.array([[1.0, 2.0, 1.0],
                          [2.0, 4.0, 2.0],
                          [1.0, 2.0, 1.0]], jnp.float32) / 16.0  # unused in forward

    key = jax.random.PRNGKey(0)
    kp, kx = jax.random.split(key)
    params = init_params(kp, input_size, num_channels, kernel_size,
                         input_timesteps, output_size)
    inputs = jax.random.normal(kx, (B, H, input_timesteps, input_size), jnp.float32)

    fwd = jax.jit(functools.partial(
        gtcn_forward, num_channels=tuple(num_channels),
        kernel_size=kernel_size, output_size=output_size))
    out = jax.block_until_ready(fwd(inputs, params))

    ref = reference_forward(inputs, params, kernel_size=kernel_size,
                            output_size=output_size)
    assert out.shape == ref.shape == (B, H, output_size), (out.shape, ref.shape)
    max_err = float(jnp.max(jnp.abs(out - ref)))
    assert max_err < 2e-3, f"mismatch vs reference: {max_err}"

    # TODO(synk): dropout implemented as inference-mode identity (no RNG masking).
    print("KERNEL_OK")
</pallas_src>

<mosaic_0001>
module attributes {stable_mosaic.version = 11 : i64} {
  func.func @kernel(%arg0: i32, %arg1: memref<8x32xf32, #tpu.memory_space<vmem>>, %arg2: memref<32x64xf32, #tpu.memory_space<vmem>>, %arg3: memref<1x64xf32, #tpu.memory_space<vmem>>, %arg4: memref<64x64xf32, #tpu.memory_space<vmem>>, %arg5: memref<1x64xf32, #tpu.memory_space<vmem>>, %arg6: memref<32x64xf32, #tpu.memory_space<vmem>>, %arg7: memref<1x64xf32, #tpu.memory_space<vmem>>, %arg8: memref<64x64xf32, #tpu.memory_space<vmem>>, %arg9: memref<1x64xf32, #tpu.memory_space<vmem>>, %arg10: memref<64x64xf32, #tpu.memory_space<vmem>>, %arg11: memref<1x64xf32, #tpu.memory_space<vmem>>, %arg12: memref<64x64xf32, #tpu.memory_space<vmem>>, %arg13: memref<1x64xf32, #tpu.memory_space<vmem>>, %arg14: memref<8x64xf32, #tpu.memory_space<vmem>>) attributes {dimension_semantics = [#tpu.dimension_semantics<parallel>], iteration_bounds = array<i64: 1>, scalar_prefetch = 0 : i64, scratch_operands = 0 : i64, tpu.core_type = #tpu.core_type<tc>, window_params = [{transform_indices = @transform_0, window_bounds = array<i64: 8, 32>}, {pipeline_mode = #tpu.pipeline_mode<synchronous>, transform_indices = @transform_1, window_bounds = array<i64: 32, 64>}, {pipeline_mode = #tpu.pipeline_mode<synchronous>, transform_indices = @transform_2, window_bounds = array<i64: 1, 64>}, {pipeline_mode = #tpu.pipeline_mode<synchronous>, transform_indices = @transform_3, window_bounds = array<i64: 64, 64>}, {pipeline_mode = #tpu.pipeline_mode<synchronous>, transform_indices = @transform_4, window_bounds = array<i64: 1, 64>}, {pipeline_mode = #tpu.pipeline_mode<synchronous>, transform_indices = @transform_5, window_bounds = array<i64: 32, 64>}, {pipeline_mode = #tpu.pipeline_mode<synchronous>, transform_indices = @transform_6, window_bounds = array<i64: 1, 64>}, {pipeline_mode = #tpu.pipeline_mode<synchronous>, transform_indices = @transform_7, window_bounds = array<i64: 64, 64>}, {pipeline_mode = #tpu.pipeline_mode<synchronous>, transform_indices = @transform_8, window_bounds = array<i64: 1, 64>}, {pipeline_mode = #tpu.pipeline_mode<synchronous>, transform_indices = @transform_9, window_bounds = array<i64: 64, 64>}, {pipeline_mode = #tpu.pipeline_mode<synchronous>, transform_indices = @transform_10, window_bounds = array<i64: 1, 64>}, {pipeline_mode = #tpu.pipeline_mode<synchronous>, transform_indices = @transform_11, window_bounds = array<i64: 64, 64>}, {pipeline_mode = #tpu.pipeline_mode<synchronous>, transform_indices = @transform_12, window_bounds = array<i64: 1, 64>}, {transform_indices = @transform_13, window_bounds = array<i64: 8, 64>}]} {
    %c0 = arith.constant 0 : index
    %c0_0 = arith.constant 0 : index
    %0 = vector.load %arg1[%c0, %c0_0] : memref<8x32xf32, #tpu.memory_space<vmem>>, vector<8x32xf32>
    %c0_1 = arith.constant 0 : index
    %c0_2 = arith.constant 0 : index
    %1 = vector.load %arg2[%c0_1, %c0_2] : memref<32x64xf32, #tpu.memory_space<vmem>>, vector<32x64xf32>
    %cst = arith.constant dense<0.000000e+00> : vector<8x64xf32>
    %2 = tpu.matmul %0, %1, %cst {dimension_numbers = #tpu.dot_dimension_numbers<[1], [0], [0], [1], [0, 0, 1, 1], [], []>} : vector<8x32xf32>, vector<32x64xf32>, vector<8x64xf32> -> vector<8x64xf32>
    %c0_3 = arith.constant 0 : index
    %c0_4 = arith.constant 0 : index
    %3 = vector.load %arg3[%c0_3, %c0_4] : memref<1x64xf32, #tpu.memory_space<vmem>>, vector<1x64xf32>
    %4 = vector.broadcast %3 : vector<1x64xf32> to vector<8x64xf32>
    %5 = arith.addf %2, %4 : vector<8x64xf32>
    %6 = math.tanh %5 : vector<8x64xf32>
    %c0_5 = arith.constant 0 : index
    %c0_6 = arith.constant 0 : index
    %7 = vector.load %arg4[%c0_5, %c0_6] : memref<64x64xf32, #tpu.memory_space<vmem>>, vector<64x64xf32>
    %cst_7 = arith.constant dense<0.000000e+00> : vector<8x64xf32>
    %8 = tpu.matmul %6, %7, %cst_7 {dimension_numbers = #tpu.dot_dimension_numbers<[1], [0], [0], [1], [0, 0, 1, 1], [], []>} : vector<8x64xf32>, vector<64x64xf32>, vector<8x64xf32> -> vector<8x64xf32>
    %c0_8 = arith.constant 0 : index
    %c0_9 = arith.constant 0 : index
    %9 = vector.load %arg5[%c0_8, %c0_9] : memref<1x64xf32, #tpu.memory_space<vmem>>, vector<1x64xf32>
    %10 = vector.broadcast %9 : vector<1x64xf32> to vector<8x64xf32>
    %11 = arith.addf %8, %10 : vector<8x64xf32>
    %12 = math.tanh %11 : vector<8x64xf32>
    %c0_10 = arith.constant 0 : index
    %c0_11 = arith.constant 0 : index
    %13 = vector.load %arg6[%c0_10, %c0_11] : memref<32x64xf32, #tpu.memory_space<vmem>>, vector<32x64xf32>
    %cst_12 = arith.constant dense<0.000000e+00> : vector<8x64xf32>
    %14 = tpu.matmul %0, %13, %cst_12 {dimension_numbers = #tpu.dot_dimension_numbers<[1], [0], [0], [1], [0, 0, 1, 1], [], []>} : vector<8x32xf32>, vector<32x64xf32>, vector<8x64xf32> -> vector<8x64xf32>
    %c0_13 = arith.constant 0 : index
    %c0_14 = arith.constant 0 : index
    %15 = vector.load %arg7[%c0_13, %c0_14] : memref<1x64xf32, #tpu.memory_space<vmem>>, vector<1x64xf32>
    %16 = vector.broadcast %15 : vector<1x64xf32> to vector<8x64xf32>
    %17 = arith.addf %14, %16 : vector<8x64xf32>
    %18 = arith.addf %12, %17 : vector<8x64xf32>
    %cst_15 = arith.constant 0.000000e+00 : f32
    %19 = vector.broadcast %cst_15 : f32 to vector<8x64xf32>
    %20 = arith.maximumf %18, %19 : vector<8x64xf32>
    %c0_16 = arith.constant 0 : index
    %c0_17 = arith.constant 0 : index
    %21 = vector.load %arg8[%c0_16, %c0_17] : memref<64x64xf32, #tpu.memory_space<vmem>>, vector<64x64xf32>
    %cst_18 = arith.constant dense<0.000000e+00> : vector<8x64xf32>
    %22 = tpu.matmul %20, %21, %cst_18 {dimension_numbers = #tpu.dot_dimension_numbers<[1], [0], [0], [1], [0, 0, 1, 1], [], []>} : vector<8x64xf32>, vector<64x64xf32>, vector<8x64xf32> -> vector<8x64xf32>
    %c0_19 = arith.constant 0 : index
    %c0_20 = arith.constant 0 : index
    %23 = vector.load %arg9[%c0_19, %c0_20] : memref<1x64xf32, #tpu.memory_space<vmem>>, vector<1x64xf32>
    %24 = vector.broadcast %23 : vector<1x64xf32> to vector<8x64xf32>
    %25 = arith.addf %22, %24 : vector<8x64xf32>
    %26 = math.tanh %25 : vector<8x64xf32>
    %c0_21 = arith.constant 0 : index
    %c0_22 = arith.constant 0 : index
    %27 = vector.load %arg10[%c0_21, %c0_22] : memref<64x64xf32, #tpu.memory_space<vmem>>, vector<64x64xf32>
    %cst_23 = arith.constant dense<0.000000e+00> : vector<8x64xf32>
    %28 = tpu.matmul %26, %27, %cst_23 {dimension_numbers = #tpu.dot_dimension_numbers<[1], [0], [0], [1], [0, 0, 1, 1], [], []>} : vector<8x64xf32>, vector<64x64xf32>, vector<8x64xf32> -> vector<8x64xf32>
    %c0_24 = arith.constant 0 : index
    %c0_25 = arith.constant 0 : index
    %29 = vector.load %arg11[%c0_24, %c0_25] : memref<1x64xf32, #tpu.memory_space<vmem>>, vector<1x64xf32>
    %30 = vector.broadcast %29 : vector<1x64xf32> to vector<8x64xf32>
    %31 = arith.addf %28, %30 : vector<8x64xf32>
    %32 = math.tanh %31 : vector<8x64xf32>
    %c0_26 = arith.constant 0 : index
    %c0_27 = arith.constant 0 : index
    %33 = vector.load %arg12[%c0_26, %c0_27] : memref<64x64xf32, #tpu.memory_space<vmem>>, vector<64x64xf32>
    %cst_28 = arith.constant dense<0.000000e+00> : vector<8x64xf32>
    %34 = tpu.matmul %20, %33, %cst_28 {dimension_numbers = #tpu.dot_dimension_numbers<[1], [0], [0], [1], [0, 0, 1, 1], [], []>} : vector<8x64xf32>, vector<64x64xf32>, vector<8x64xf32> -> vector<8x64xf32>
    %c0_29 = arith.constant 0 : index
    %c0_30 = arith.constant 0 : index
    %35 = vector.load %arg13[%c0_29, %c0_30] : memref<1x64xf32, #tpu.memory_space<vmem>>, vector<1x64xf32>
    %36 = vector.broadcast %35 : vector<1x64xf32> to vector<8x64xf32>
    %37 = arith.addf %34, %36 : vector<8x64xf32>
    %38 = arith.addf %32, %37 : vector<8x64xf32>
    %cst_31 = arith.constant 0.000000e+00 : f32
    %39 = vector.broadcast %cst_31 : f32 to vector<8x64xf32>
    %40 = arith.maximumf %38, %39 : vector<8x64xf32>
    %c0_32 = arith.constant 0 : index
    %c0_33 = arith.constant 0 : index
    %41 = vector.load %arg14[%c0_32, %c0_33] : memref<8x64xf32, #tpu.memory_space<vmem>>, vector<8x64xf32>
    tpu.vector_store %arg14[%c0_32, %c0_33], %40 {strides = array<i32>} : memref<8x64xf32, #tpu.memory_space<vmem>>, vector<8x64xf32>,
    return
  }
  func.func @transform_0(%arg0: i32) -> (i32, i32) {
    %c0_i32 = arith.constant 0 : i32
    %c0_i32_0 = arith.constant 0 : i32
    return %arg0, %c0_i32 : i32, i32
  }
  func.func @transform_1(%arg0: i32) -> (i32, i32) {
    %c0_i32 = arith.constant 0 : i32
    %c0_i32_0 = arith.constant 0 : i32
    %c0_i32_1 = arith.constant 0 : i32
    return %c0_i32, %c0_i32_0 : i32, i32
  }
  func.func @transform_2(%arg0: i32) -> (i32, i32) {
    %c0_i32 = arith.constant 0 : i32
    %c0_i32_0 = arith.constant 0 : i32
    %c0_i32_1 = arith.constant 0 : i32
    return %c0_i32, %c0_i32_0 : i32, i32
  }
  func.func @transform_3(%arg0: i32) -> (i32, i32) {
    %c0_i32 = arith.constant 0 : i32
    %c0_i32_0 = arith.constant 0 : i32
    %c0_i32_1 = arith.constant 0 : i32
    return %c0_i32, %c0_i32_0 : i32, i32
  }
  func.func @transform_4(%arg0: i32) -> (i32, i32) {
    %c0_i32 = arith.constant 0 : i32
    %c0_i32_0 = arith.constant 0 : i32
    %c0_i32_1 = arith.constant 0 : i32
    return %c0_i32, %c0_i32_0 : i32, i32
  }
  func.func @transform_5(%arg0: i32) -> (i32, i32) {
    %c0_i32 = arith.constant 0 : i32
    %c0_i32_0 = arith.constant 0 : i32
    %c0_i32_1 = arith.constant 0 : i32
    return %c0_i32, %c0_i32_0 : i32, i32
  }
  func.func @transform_6(%arg0: i32) -> (i32, i32) {
    %c0_i32 = arith.constant 0 : i32
    %c0_i32_0 = arith.constant 0 : i32
    %c0_i32_1 = arith.constant 0 : i32
    return %c0_i32, %c0_i32_0 : i32, i32
  }
  func.func @transform_7(%arg0: i32) -> (i32, i32) {
    %c0_i32 = arith.constant 0 : i32
    %c0_i32_0 = arith.constant 0 : i32
    %c0_i32_1 = arith.constant 0 : i32
    return %c0_i32, %c0_i32_0 : i32, i32
  }
  func.func @transform_8(%arg0: i32) -> (i32, i32) {
    %c0_i32 = arith.constant 0 : i32
    %c0_i32_0 = arith.constant 0 : i32
    %c0_i32_1 = arith.constant 0 : i32
    return %c0_i32, %c0_i32_0 : i32, i32
  }
  func.func @transform_9(%arg0: i32) -> (i32, i32) {
    %c0_i32 = arith.constant 0 : i32
    %c0_i32_0 = arith.constant 0 : i32
    %c0_i32_1 = arith.constant 0 : i32
    return %c0_i32, %c0_i32_0 : i32, i32
  }
  func.func @transform_10(%arg0: i32) -> (i32, i32) {
    %c0_i32 = arith.constant 0 : i32
    %c0_i32_0 = arith.constant 0 : i32
    %c0_i32_1 = arith.constant 0 : i32
    return %c0_i32, %c0_i32_0 : i32, i32
  }
  func.func @transform_11(%arg0: i32) -> (i32, i32) {
    %c0_i32 = arith.constant 0 : i32
    %c0_i32_0 = arith.constant 0 : i32
    %c0_i32_1 = arith.constant 0 : i32
    return %c0_i32, %c0_i32_0 : i32, i32
  }
  func.func @transform_12(%arg0: i32) -> (i32, i32) {
    %c0_i32 = arith.constant 0 : i32
    %c0_i32_0 = arith.constant 0 : i32
    %c0_i32_1 = arith.constant 0 : i32
    return %c0_i32, %c0_i32_0 : i32, i32
  }
  func.func @transform_13(%arg0: i32) -> (i32, i32) {
    %c0_i32 = arith.constant 0 : i32
    %c0_i32_0 = arith.constant 0 : i32
    return %arg0, %c0_i32 : i32, i32
  }
}

module attributes {stable_mosaic.version = 11 : i64} {
  func.func @_linear_kernel(%arg0: i32, %arg1: i32, %arg2: memref<8x64xf32, #tpu.memory_space<vmem>>, %arg3: memref<64x6xf32, #tpu.memory_space<vmem>>, %arg4: memref<1x6xf32, #tpu.memory_space<vmem>>, %arg5: memref<8x6xf32, #tpu.memory_space<vmem>>, %arg6: memref<8x6xf32, #tpu.memory_space<vmem>>) attributes {dimension_semantics = [#tpu.dimension_semantics<parallel>, #tpu.dimension_semantics<arbitrary>], iteration_bounds = array<i64: 1, 1>, scalar_prefetch = 0 : i64, scratch_operands = 1 : i64, tpu.core_type = #tpu.core_type<tc>, window_params = [{transform_indices = @transform_0, window_bounds = array<i64: 8, 64>}, {transform_indices = @transform_1, window_bounds = array<i64: 64, 6>}, {pipeline_mode = #tpu.pipeline_mode<synchronous>, transform_indices = @transform_2, window_bounds = array<i64: 1, 6>}, {transform_indices = @transform_3, window_bounds = array<i64: 8, 6>}]} {
    %c0_i32 = arith.constant 0 : i32
    %0 = arith.cmpi eq, %arg1, %c0_i32 : i32
    %1 = arith.extui %0 : i1 to i32
    %c0_i32_0 = arith.constant 0 : i32
    %2 = arith.cmpi ne, %1, %c0_i32_0 : i32
    scf.if %2 {
      %cst_10 = arith.constant 0.000000e+00 : f32
      %12 = vector.broadcast %cst_10 : f32 to vector<8x6xf32>
      %c0_11 = arith.constant 0 : index
      %c0_12 = arith.constant 0 : index
      %13 = vector.load %arg6[%c0_11, %c0_12] : memref<8x6xf32, #tpu.memory_space<vmem>>, vector<8x6xf32>
      tpu.vector_store %arg6[%c0_11, %c0_12], %12 {strides = array<i32>} : memref<8x6xf32, #tpu.memory_space<vmem>>, vector<8x6xf32>,
    } else {
    }
    %c0 = arith.constant 0 : index
    %c0_1 = arith.constant 0 : index
    %3 = vector.load %arg6[%c0, %c0_1] : memref<8x6xf32, #tpu.memory_space<vmem>>, vector<8x6xf32>
    %c0_2 = arith.constant 0 : index
    %c0_3 = arith.constant 0 : index
    %4 = vector.load %arg2[%c0_2, %c0_3] : memref<8x64xf32, #tpu.memory_space<vmem>>, vector<8x64xf32>
    %c0_4 = arith.constant 0 : index
    %c0_5 = arith.constant 0 : index
    %5 = vector.load %arg3[%c0_4, %c0_5] : memref<64x6xf32, #tpu.memory_space<vmem>>, vector<64x6xf32>
    %cst = arith.constant dense<0.000000e+00> : vector<8x6xf32>
    %6 = tpu.matmul %4, %5, %cst {dimension_numbers = #tpu.dot_dimension_numbers<[1], [0], [0], [1], [0, 0, 1, 1], [], []>} : vector<8x64xf32>, vector<64x6xf32>, vector<8x6xf32> -> vector<8x6xf32>
    %7 = arith.addf %3, %6 : vector<8x6xf32>
    %c0_6 = arith.constant 0 : index
    %c0_7 = arith.constant 0 : index
    %8 = vector.load %arg6[%c0_6, %c0_7] : memref<8x6xf32, #tpu.memory_space<vmem>>, vector<8x6xf32>
    tpu.vector_store %arg6[%c0_6, %c0_7], %7 {strides = array<i32>} : memref<8x6xf32, #tpu.memory_space<vmem>>, vector<8x6xf32>,
    %c0_i32_8 = arith.constant 0 : i32
    %9 = arith.cmpi eq, %arg1, %c0_i32_8 : i32
    %10 = arith.extui %9 : i1 to i32
    %c0_i32_9 = arith.constant 0 : i32
    %11 = arith.cmpi ne, %10, %c0_i32_9 : i32
    scf.if %11 {
      %c0_10 = arith.constant 0 : index
      %c0_11 = arith.constant 0 : index
      %12 = vector.load %arg6[%c0_10, %c0_11] : memref<8x6xf32, #tpu.memory_space<vmem>>, vector<8x6xf32>
      %c0_12 = arith.constant 0 : index
      %c0_13 = arith.constant 0 : index
      %13 = vector.load %arg4[%c0_12, %c0_13] : memref<1x6xf32, #tpu.memory_space<vmem>>, vector<1x6xf32>
      %14 = vector.broadcast %13 : vector<1x6xf32> to vector<8x6xf32>
      %15 = arith.addf %12, %14 : vector<8x6xf32>
      %c0_14 = arith.constant 0 : index
      %c0_15 = arith.constant 0 : index
      %16 = vector.load %arg5[%c0_14, %c0_15] : memref<8x6xf32, #tpu.memory_space<vmem>>, vector<8x6xf32>
      tpu.vector_store %arg5[%c0_14, %c0_15], %15 {strides = array<i32>} : memref<8x6xf32, #tpu.memory_space<vmem>>, vector<8x6xf32>,
    } else {
    }
    return
  }
  func.func @transform_0(%arg0: i32, %arg1: i32) -> (i32, i32) {
    %c0_i32 = arith.constant 0 : i32
    return %arg0, %arg1 : i32, i32
  }
  func.func @transform_1(%arg0: i32, %arg1: i32) -> (i32, i32) {
    %c0_i32 = arith.constant 0 : i32
    %c0_i32_0 = arith.constant 0 : i32
    return %arg1, %c0_i32 : i32, i32
  }
  func.func @transform_2(%arg0: i32, %arg1: i32) -> (i32, i32) {
    %c0_i32 = arith.constant 0 : i32
    %c0_i32_0 = arith.constant 0 : i32
    %c0_i32_1 = arith.constant 0 : i32
    return %c0_i32, %c0_i32_0 : i32, i32
  }
  func.func @transform_3(%arg0: i32, %arg1: i32) -> (i32, i32) {
    %c0_i32 = arith.constant 0 : i32
    %c0_i32_0 = arith.constant 0 : i32
    return %arg0, %c0_i32 : i32, i32
  }
}

</mosaic_0001>

<llo_original>
// kernel: tile.33
$region0: #{tile.33}
  #allocation0 [shape = 's32[1]{0}', space=sflag, size = 0x4, scoped, tag = 'scoped memory for tile.33']
  %s0 = inlined_call_operand.vmem [shape: f32[8], index: 0, kind: input, shape index: {}]
  %s1 = inlined_call_operand.vmem [shape: f32[8,8], index: 1, kind: output, shape index: {}]
  // Predicated region
  $region2: #{tile.33} parent=0 // pred_check
    _
  $region3: #{tile.33} parent=0 // pred_check_branch
    %3 = sbr.rel (0) target = $region5
  $region4: #{tile.33} parent=0 // pred_region
    _
  $region5: #{tile.33} parent=0 // pred_fallthru
    _
  %v4 = vld [vmem:[%s0] ss:$0 sm:$0xff]
  %5 = vst [vmem:[%s1] sm:$0xff] %v4

// kernel: tile.34
$region0: #{tile.34}
  %s0 = inlined_call_operand.vmem [shape: f32[8,8], index: 0, kind: input, shape index: {}]
  %s1 = inlined_call_operand.vmem [shape: f32[1,64], index: 1, kind: output, shape index: {}]
  $region1: #{tile.34} parent=0
    #allocation0 [shape = 'u8[4096]{0}', space=vmem, size = 0x1000, scoped, tag = 'scoped mem for output reshape']
    %v2 = vld [vmem:[%s0] sm:$0x1]
    %vm3 = vcmask 64512
    %4 = vst.msk [vmem:[#allocation0] sm:$0x1] %vm3, %v2
    %s5 = scalar_lea.vmem %s0, 7
    %v6 = vld [vmem:[%s5] sm:$0x1]
    %7 = vrot.lane.b32.xlu0 %v6, 56
    %v8 = vpop.permute.xlu0 %7
    %vm9 = vcmask 523712
    %10 = vst.msk [vmem:[#allocation0] sm:$0x1] %vm9, %v8
    %s11 = scalar_lea.vmem %s0, 6
    %v12 = vld [vmem:[%s11] sm:$0x1]
    %13 = vrot.lane.b32.xlu0 %v12, 48
    %v14 = vpop.permute.xlu0 %13
    %vm15 = vcmask 458112
    %16 = vst.msk [vmem:[#allocation0] sm:$0x1] %vm15, %v14
    %s17 = scalar_lea.vmem %s0, 5
    %v18 = vld [vmem:[%s17] sm:$0x1]
    %19 = vrot.lane.b32.xlu0 %v18, 40
    %v20 = vpop.permute.xlu0 %19
    %vm21 = vcmask 392512
    %22 = vst.msk [vmem:[#allocation0] sm:$0x1] %vm21, %v20
    %s23 = scalar_lea.vmem %s0, 4
    %v24 = vld [vmem:[%s23] sm:$0x1]
    %25 = vrot.lane.b32.xlu0 %v24, 32
    %v26 = vpop.permute.xlu0 %25
    %vm27 = vcmask 326912
    %28 = vst.msk [vmem:[#allocation0] sm:$0x1] %vm27, %v26
    %s29 = scalar_lea.vmem %s0, 3
    %v30 = vld [vmem:[%s29] sm:$0x1]
    %31 = vrot.lane.b32.xlu0 %v30, 24
    %v32 = vpop.permute.xlu0 %31
    %vm33 = vcmask 261312
    %34 = vst.msk [vmem:[#allocation0] sm:$0x1] %vm33, %v32
    %s35 = scalar_lea.vmem %s0, 2
    %v36 = vld [vmem:[%s35] sm:$0x1]
    %37 = vrot.lane.b32.xlu0 %v36, 16
    %v38 = vpop.permute.xlu0 %37
    %vm39 = vcmask 195712
    %40 = vst.msk [vmem:[#allocation0] sm:$0x1] %vm39, %v38
    %s41 = scalar_lea.vmem %s0, 1
    %v42 = vld [vmem:[%s41] sm:$0x1]
    %43 = vrot.lane.b32.xlu0 %v42, 8
    %v44 = vpop.permute.xlu0 %43
    %vm45 = vcmask 130112
    %46 = vst.msk [vmem:[#allocation0] sm:$0x1] %vm45, %v44
    %s48 = sshllo.u32 0, 1
    %v50 = vld [vmem:[#allocation0] sm:%s48]
    %s51 = sshllo.u32 0, 1
    %52 = vst [vmem:[%s1] sm:%s51] %v50

// kernel: gtcn_forward.3
$region0: #{gtcn_forward.3}
  #allocation0 [shape = 'u32[]', space=smem, size = 0x4, offset = 0x4, fixed_abs, tag = 'smem constant byte address 0x4 - core index']
  #allocation1 [shape = 'u32[144,128]{1,0:T(1,128)}', space=vmem, size = 0x12000, scoped, tag = 'internal scratch']
  #allocation2 [shape = 'f32[8,6]{1,0:T(8,128)}', space=vmem, size = 0x1000, scoped, tag = 'scratch operand']
  %s0 = inlined_call_operand.vmem [shape: f32[8,64], index: 0, kind: input, shape index: {}]
  %s1 = inlined_call_operand.vmem [shape: f32[64,6], index: 1, kind: input, shape index: {}]
  %s2 = inlined_call_operand.vmem [shape: f32[1,6], index: 2, kind: input, shape index: {}]
  %s3 = inlined_call_operand.hbm [shape: f32[8,6], index: 3, kind: output, shape index: {}]
  %s4 = sld [smem:[#allocation0]]
  $region30: #{gtcn_forward.3} parent=0
    _
  %s6 = ssub.s32 1, %s4
  %s7 = scalar_select 0, %s6, %s4
  $region1: #{gtcn_forward.3} parent=0
    #allocation3 [shape = 'u8[4096]{0}', space=vmem, size = 0x1000, scoped, tag = 'output window, operand 0, single buffered']
    #allocation4 [shape = 's32[1]{0}', space=sflag, size = 0x4, scoped, tag = 'scoped memory for gtcn_forward.3']
    %8 = vsyncpa [#allocation4], 0
    // Predicated region
    $region2: #{gtcn_forward.3} parent=1 // pred_check
      _
    $region3: #{gtcn_forward.3} parent=1 // pred_check_branch
      %10 = sbr.rel (0) target = $region5
    $region4: #{gtcn_forward.3} parent=1 // pred_region
      _
    $region5: #{gtcn_forward.3} parent=1 // pred_fallthru
      _
    // Predicated region
    $region6: #{gtcn_forward.3} parent=1 // pred_check
      _
    $region7: #{gtcn_forward.3} parent=1 // pred_check_branch
      %12 = sbr.rel (0) target = $region9
    $region8: #{gtcn_forward.3} parent=1 // pred_region
      _
    $region9: #{gtcn_forward.3} parent=1 // pred_fallthru
      _
    // Predicated region
    $region10: #{gtcn_forward.3} parent=1 // pred_check
      _
    $region11: #{gtcn_forward.3} parent=1 // pred_check_branch
      %14 = sbr.rel (0) target = $region13
    $region12: #{gtcn_forward.3} parent=1 // pred_region
      _
    $region13: #{gtcn_forward.3} parent=1 // pred_fallthru
      _
    %p15 = scmp.eq.s32.totalorder 0, 0
    // Predicated region
    $region14: #{gtcn_forward.3} parent=1 // pred_check
      %p16 = pneg %p15
    $region15: #{gtcn_forward.3} parent=1 // pred_check_branch
      %18 = sbr.rel (%p16) target = $region17
    $region16: #{gtcn_forward.3} parent=1 // pred_region
      %vm19 = vcmask 48128
      %20 = vst.msk [vmem:[#allocation2] sm:$0xff] %vm19, 0.0
    $region17: #{gtcn_forward.3} parent=1 // pred_fallthru
      _
    %v21 = vld [vmem:[#allocation2] sm:$0xff]
    %v22 = vld [vmem:[%s0] sm:$0xff]
    %v23 = vld [vmem:[%s1] sm:$0xff]
    %v24 = vld [vmem:[%s1 + $0x8] sm:$0xff]
    %v25 = vld [vmem:[%s1 + $0x10] sm:$0xff]
    %v26 = vld [vmem:[%s1 + $0x18] sm:$0xff]
    %v27 = vld [vmem:[%s1 + $0x20] sm:$0xff]
    %v28 = vld [vmem:[%s1 + $0x28] sm:$0xff]
    %v29 = vld [vmem:[%s1 + $0x30] sm:$0xff]
    %v30 = vld [vmem:[%s1 + $0x38] sm:$0xff]
    %vm31 = vcmask 523264
    %v33 = vsel %vm31, %v22, 0
    %35 = vmatprep.subr.mxu0 0.0
    %36 = vmatpush1.msra.mxu0 %v23
    %37 = vmatprep.subr.mxu0 0.0
    %38 = vmatpush1.msra.mxu0 %v24
    %39 = vmatprep.subr.mxu0 0.0
    %40 = vmatpush1.msra.mxu0 %v25
    %41 = vmatprep.subr.mxu0 0.0
    %42 = vmatpush1.msra.mxu0 %v26
    %43 = vmatprep.subr.mxu0 0.0
    %44 = vmatpush1.msra.mxu0 %v27
    %45 = vmatprep.subr.mxu0 0.0
    %46 = vmatpush1.msra.mxu0 %v28
    %47 = vmatprep.subr.mxu0 0.0
    %48 = vmatpush1.msra.mxu0 %v29
    %49 = vmatprep.subr.mxu0 0.0
    %50 = vmatpush1.msra.mxu0 %v30
    %51 = vmatprep.subr.mxu0 0.0
    %52 = vmatpush1.msra.mxu0 0.0
    %53 = vmatprep.subr.mxu0 0.0
    %54 = vmatpush1.msra.mxu0 0.0
    %55 = vmatprep.subr.mxu0 0.0
    %56 = vmatpush1.msra.mxu0 0.0
    %57 = vmatprep.subr.mxu0 0.0
    %58 = vmatpush1.msra.mxu0 0.0
    %59 = vmatprep.subr.mxu0 0.0
    %60 = vmatpush1.msra.mxu0 0.0
    %61 = vmatprep.subr.mxu0 0.0
    %62 = vmatpush1.msra.mxu0 0.0
    %63 = vmatprep.subr.mxu0 0.0
    %64 = vmatpush1.msra.mxu0 0.0
    %65 = vmatprep.subr.mxu0 0.0
    %66 = vmatpush1.msra.mxu0 0.0
    %67 = vmatprep.subr.mxu0 0.0
    %68 = vmatpush1.msra.mxu0 0.0
    %69 = vmatprep.subr.mxu0 0.0
    %70 = vmatpush1.msra.mxu0 0.0
    %71 = vmatprep.subr.mxu0 0.0
    %72 = vmatpush1.msra.mxu0 0.0
    %73 = vmatprep.subr.mxu0 0.0
    %74 = vmatpush1.msra.mxu0 0.0
    %75 = vmatprep.subr.mxu0 0.0
    %76 = vmatpush1.msra.mxu0 0.0
    %77 = vmatprep.subr.mxu0 0.0
    %78 = vmatpush1.msra.mxu0 0.0
    %79 = vmatprep.subr.mxu0 0.0
    %80 = vmatpush1.msra.mxu0 0.0
    %81 = vmatprep.subr.mxu0 0.0
    %82 = vmatpush1.msra.mxu0 0.0
    %83 = vmatprep.subr.mxu0 0.0
    %84 = vmatpush1.msra.mxu0 0.0
    %85 = vmatprep.subr.mxu0 0.0
    %86 = vmatpush1.msra.mxu0 0.0
    %87 = vmatprep.subr.mxu0 0.0
    %88 = vmatpush1.msra.mxu0 0.0
    %89 = vmatprep.subr.mxu0 0.0
    %90 = vmatpush1.msra.mxu0 0.0
    %91 = vmatprep.subr.mxu0 0.0
    %92 = vmatpush1.msra.mxu0 0.0
    %93 = vmatprep.subr.mxu0 0.0
    %94 = vmatpush1.msra.mxu0 0.0
    %95 = vmatprep.subr.mxu0 0.0
    %96 = vmatpush1.msra.mxu0 0.0
    %97 = vmatprep.subr.mxu0 0.0
    %98 = vmatpush1.msra.mxu0 0.0
    %99 = vmatprep.mubr.f32.mxu0 0.0
    %100 = vmatmul.mubr.f32.gmra.mrb[0].mxu0 %v33
    %v101 = vpop.f32.mrb[0].mxu0
    %v102 = vadd.f32 0.0, %v101
    %v103 = vpop.f32.mrb[0].mxu0
    %104 = vdwg.mxu0
    %v105 = vadd.f32 %v21, %v102
    %vm106 = vcmask 48128
    %107 = vst.msk [vmem:[#allocation2] sm:$0xff] %vm106, %v105
    // Predicated region
    $region18: #{gtcn_forward.3} parent=1 // pred_check
      %p108 = pneg %p15
    $region19: #{gtcn_forward.3} parent=1 // pred_check_branch
      %110 = sbr.rel (%p108) target = $region21
    $region20: #{gtcn_forward.3} parent=1 // pred_region
      %v111 = vld [vmem:[#allocation2] sm:$0xff]
      %v112 = vld [vmem:[%s2] sm:$0x1]
      %v114 = vlaneseq
      %v115 = vshrl.u32 %v114, 7
      %v116 = vsub.s32 0, %v115
      %v117 = vrot.slane %v112, %v116
      %v119 = vadd.f32 %v111, %v117
      %120 = vst.msk [vmem:[#allocation3] sm:$0xff] %vm106, %v119
    $region21: #{gtcn_forward.3} parent=1 // pred_fallthru
      _
    // Predicated region
    $region22: #{gtcn_forward.3} parent=1 // pred_check
      _
    $region23: #{gtcn_forward.3} parent=1 // pred_check_branch
      %122 = sbr.rel (0) target = $region25
    $region24: #{gtcn_forward.3} parent=1 // pred_region
      %s124 = ssub.s32 128, 128
      %125 = vsyncadd [#allocation4], %s124
      %s127 = sshll.u32 [#allocation3], 4
      %s128 = int_to_ptr.vmem [resolvable:$true] %s127
      %130 = dma.vmem_to_hbm [thread:$0]  %s128, 128, %s3, [#allocation4]
    $region25: #{gtcn_forward.3} parent=1 // pred_fallthru
      _
    // Predicated region
    $region26: #{gtcn_forward.3} parent=1 // pred_check
      _
    $region27: #{gtcn_forward.3} parent=1 // pred_check_branch
      %132 = sbr.rel (0) target = $region29
    $region28: #{gtcn_forward.3} parent=1 // pred_region
      %133 = dma.done [#allocation4], 128
    $region29: #{gtcn_forward.3} parent=1 // pred_fallthru
      _
    %134 = vsyncpa [#allocation4], 1

// kernel: gtcn_forward.2
$region0: #{gtcn_forward.2}
  #allocation0 [shape = 'u32[]', space=smem, size = 0x4, offset = 0x4, fixed_abs, tag = 'smem constant byte address 0x4 - core index']
  #allocation1 [shape = 'u32[144,128]{1,0:T(1,128)}', space=vmem, size = 0x12000, scoped, tag = 'internal scratch']
  %s0 = inlined_call_operand.vmem [shape: f32[8,32], index: 0, kind: input, shape index: {}]
  %s1 = inlined_call_operand.vmem [shape: f32[32,64], index: 1, kind: input, shape index: {}]
  %s2 = inlined_call_operand.vmem [shape: f32[1,64], index: 2, kind: input, shape index: {}]
  %s3 = inlined_call_operand.vmem [shape: f32[64,64], index: 3, kind: input, shape index: {}]
  %s4 = inlined_call_operand.vmem [shape: f32[1,64], index: 4, kind: input, shape index: {}]
  %s5 = inlined_call_operand.vmem [shape: f32[32,64], index: 5, kind: input, shape index: {}]
  %s6 = inlined_call_operand.vmem [shape: f32[1,64], index: 6, kind: input, shape index: {}]
  %s7 = inlined_call_operand.vmem [shape: f32[64,64], index: 7, kind: input, shape index: {}]
  %s8 = inlined_call_operand.vmem [shape: f32[1,64], index: 8, kind: input, shape index: {}]
  %s9 = inlined_call_operand.vmem [shape: f32[64,64], index: 9, kind: input, shape index: {}]
  %s10 = inlined_call_operand.vmem [shape: f32[1,64], index: 10, kind: input, shape index: {}]
  %s11 = inlined_call_operand.vmem [shape: f32[64,64], index: 11, kind: input, shape index: {}]
  %s12 = inlined_call_operand.vmem [shape: f32[1,64], index: 12, kind: input, shape index: {}]
  %s13 = inlined_call_operand.vmem [shape: f32[8,64], index: 13, kind: output, shape index: {}]
  %s14 = sld [smem:[#allocation0]]
  $region62: #{gtcn_forward.2} parent=0
    _
  %s16 = ssub.s32 1, %s14
  %s17 = scalar_select 0, %s16, %s14
  // Predicated region
  $region2: #{gtcn_forward.2} parent=0 // pred_check
    _
  $region3: #{gtcn_forward.2} parent=0 // pred_check_branch
    %19 = sbr.rel (0) target = $region5
  $region4: #{gtcn_forward.2} parent=0 // pred_region
    _
  $region5: #{gtcn_forward.2} parent=0 // pred_fallthru
    _
  // Predicated region
  $region6: #{gtcn_forward.2} parent=0 // pred_check
    _
  $region7: #{gtcn_forward.2} parent=0 // pred_check_branch
    %21 = sbr.rel (0) target = $region9
  $region8: #{gtcn_forward.2} parent=0 // pred_region
    _
  $region9: #{gtcn_forward.2} parent=0 // pred_fallthru
    _
  // Predicated region
  $region10: #{gtcn_forward.2} parent=0 // pred_check
    _
  $region11: #{gtcn_forward.2} parent=0 // pred_check_branch
    %23 = sbr.rel (0) target = $region13
  $region12: #{gtcn_forward.2} parent=0 // pred_region
    _
  $region13: #{gtcn_forward.2} parent=0 // pred_fallthru
    _
  // Predicated region
  $region14: #{gtcn_forward.2} parent=0 // pred_check
    _
  $region15: #{gtcn_forward.2} parent=0 // pred_check_branch
    %25 = sbr.rel (0) target = $region17
  $region16: #{gtcn_forward.2} parent=0 // pred_region
    _
  $region17: #{gtcn_forward.2} parent=0 // pred_fallthru
    _
  // Predicated region
  $region18: #{gtcn_forward.2} parent=0 // pred_check
    _
  $region19: #{gtcn_forward.2} parent=0 // pred_check_branch
    %27 = sbr.rel (0) target = $region21
  $region20: #{gtcn_forward.2} parent=0 // pred_region
    _
  $region21: #{gtcn_forward.2} parent=0 // pred_fallthru
    _
  // Predicated region
  $region22: #{gtcn_forward.2} parent=0 // pred_check
    _
  $region23: #{gtcn_forward.2} parent=0 // pred_check_branch
    %29 = sbr.rel (0) target = $region25
  $region24: #{gtcn_forward.2} parent=0 // pred_region
    _
  $region25: #{gtcn_forward.2} parent=0 // pred_fallthru
    _
  // Predicated region
  $region26: #{gtcn_forward.2} parent=0 // pred_check
    _
  $region27: #{gtcn_forward.2} parent=0 // pred_check_branch
    %31 = sbr.rel (0) target = $region29
  $region28: #{gtcn_forward.2} parent=0 // pred_region
    _
  $region29: #{gtcn_forward.2} parent=0 // pred_fallthru
    _
  // Predicated region
  $region30: #{gtcn_forward.2} parent=0 // pred_check
    _
  $region31: #{gtcn_forward.2} parent=0 // pred_check_branch
    %33 = sbr.rel (0) target = $region33
  $region32: #{gtcn_forward.2} parent=0 // pred_region
    _
  $region33: #{gtcn_forward.2} parent=0 // pred_fallthru
    _
  // Predicated region
  $region34: #{gtcn_forward.2} parent=0 // pred_check
    _
  $region35: #{gtcn_forward.2} parent=0 // pred_check_branch
    %35 = sbr.rel (0) target = $region37
  $region36: #{gtcn_forward.2} parent=0 // pred_region
    _
  $region37: #{gtcn_forward.2} parent=0 // pred_fallthru
    _
  // Predicated region
  $region38: #{gtcn_forward.2} parent=0 // pred_check
    _
  $region39: #{gtcn_forward.2} parent=0 // pred_check_branch
    %37 = sbr.rel (0) target = $region41
  $region40: #{gtcn_forward.2} parent=0 // pred_region
    _
  $region41: #{gtcn_forward.2} parent=0 // pred_fallthru
    _
  // Predicated region
  $region42: #{gtcn_forward.2} parent=0 // pred_check
    _
  $region43: #{gtcn_forward.2} parent=0 // pred_check_branch
    %39 = sbr.rel (0) target = $region45
  $region44: #{gtcn_forward.2} parent=0 // pred_region
    _
  $region45: #{gtcn_forward.2} parent=0 // pred_fallthru
    _
  // Predicated region
  $region46: #{gtcn_forward.2} parent=0 // pred_check
    _
  $region47: #{gtcn_forward.2} parent=0 // pred_check_branch
    %41 = sbr.rel (0) target = $region49
  $region48: #{gtcn_forward.2} parent=0 // pred_region
    _
  $region49: #{gtcn_forward.2} parent=0 // pred_fallthru
    _
  // Predicated region
  $region50: #{gtcn_forward.2} parent=0 // pred_check
    _
  $region51: #{gtcn_forward.2} parent=0 // pred_check_branch
    %43 = sbr.rel (0) target = $region53
  $region52: #{gtcn_forward.2} parent=0 // pred_region
    _
  $region53: #{gtcn_forward.2} parent=0 // pred_fallthru
    _
  %v44 = vld [vmem:[%s0] sm:$0xff]
  %v45 = vld [vmem:[%s1] sm:$0xff]
  %v46 = vld [vmem:[%s1 + $0x8] sm:$0xff]
  %v47 = vld [vmem:[%s1 + $0x10] sm:$0xff]
  %v48 = vld [vmem:[%s1 + $0x18] sm:$0xff]
  %v49 = vld [vmem:[%s2] sm:$0x1]
  %v51 = vlaneseq
  %v52 = vshrl.u32 %v51, 7
  %v53 = vsub.s32 0, %v52
  %v54 = vrot.slane %v49, %v53
  %vm56 = vcmask 261120
  %v58 = vsel %vm56, %v44, 0
  %60 = vmatprep.subr.mxu0 0.0
  %61 = vmatpush1.msra.mxu0 %v45
  %62 = vmatprep.subr.mxu0 0.0
  %63 = vmatpush1.msra.mxu0 %v46
  %64 = vmatprep.subr.mxu0 0.0
  %65 = vmatpush1.msra.mxu0 %v47
  %66 = vmatprep.subr.mxu0 0.0
  %67 = vmatpush1.msra.mxu0 %v48
  %68 = vmatprep.subr.mxu0 0.0
  %69 = vmatpush1.msra.mxu0 0.0
  %70 = vmatprep.subr.mxu0 0.0
  %71 = vmatpush1.msra.mxu0 0.0
  %72 = vmatprep.subr.mxu0 0.0
  %73 = vmatpush1.msra.mxu0 0.0
  %74 = vmatprep.subr.mxu0 0.0
  %75 = vmatpush1.msra.mxu0 0.0
  %76 = vmatprep.subr.mxu0 0.0
  %77 = vmatpush1.msra.mxu0 0.0
  %78 = vmatprep.subr.mxu0 0.0
  %79 = vmatpush1.msra.mxu0 0.0
  %80 = vmatprep.subr.mxu0 0.0
  %81 = vmatpush1.msra.mxu0 0.0
  %82 = vmatprep.subr.mxu0 0.0
  %83 = vmatpush1.msra.mxu0 0.0
  %84 = vmatprep.subr.mxu0 0.0
  %85 = vmatpush1.msra.mxu0 0.0
  %86 = vmatprep.subr.mxu0 0.0
  %87 = vmatpush1.msra.mxu0 0.0
  %88 = vmatprep.subr.mxu0 0.0
  %89 = vmatpush1.msra.mxu0 0.0
  %90 = vmatprep.subr.mxu0 0.0
  %91 = vmatpush1.msra.mxu0 0.0
  %92 = vmatprep.subr.mxu0 0.0
  %93 = vmatpush1.msra.mxu0 0.0
  %94 = vmatprep.subr.mxu0 0.0
  %95 = vmatpush1.msra.mxu0 0.0
  %96 = vmatprep.subr.mxu0 0.0
  %97 = vmatpush1.msra.mxu0 0.0
  %98 = vmatprep.subr.mxu0 0.0
  %99 = vmatpush1.msra.mxu0 0.0
  %100 = vmatprep.subr.mxu0 0.0
  %101 = vmatpush1.msra.mxu0 0.0
  %102 = vmatprep.subr.mxu0 0.0
  %103 = vmatpush1.msra.mxu0 0.0
  %104 = vmatprep.subr.mxu0 0.0
  %105 = vmatpush1.msra.mxu0 0.0
  %106 = vmatprep.subr.mxu0 0.0
  %107 = vmatpush1.msra.mxu0 0.0
  %108 = vmatprep.subr.mxu0 0.0
  %109 = vmatpush1.msra.mxu0 0.0
  %110 = vmatprep.subr.mxu0 0.0
  %111 = vmatpush1.msra.mxu0 0.0
  %112 = vmatprep.subr.mxu0 0.0
  %113 = vmatpush1.msra.mxu0 0.0
  %114 = vmatprep.subr.mxu0 0.0
  %115 = vmatpush1.msra.mxu0 0.0
  %116 = vmatprep.subr.mxu0 0.0
  %117 = vmatpush1.msra.mxu0 0.0
  %118 = vmatprep.subr.mxu0 0.0
  %119 = vmatpush1.msra.mxu0 0.0
  %120 = vmatprep.subr.mxu0 0.0
  %121 = vmatpush1.msra.mxu0 0.0
  %122 = vmatprep.subr.mxu0 0.0
  %123 = vmatpush1.msra.mxu0 0.0
  %124 = vmatprep.mubr.f32.mxu0 0.0
  %125 = vmatmul.mubr.f32.gmra.mrb[0].mxu0 %v58
  %v126 = vpop.f32.mrb[0].mxu0
  %v127 = vadd.f32 %v54, %v126
  %v128 = vpop.f32.mrb[0].mxu0
  %129 = vdwg.mxu0
  %v130 = vtanh.pop %v127
  %v131 = vld [vmem:[%s3] sm:$0xff]
  %v132 = vld [vmem:[%s3 + $0x8] sm:$0xff]
  %v133 = vld [vmem:[%s3 + $0x10] sm:$0xff]
  %v134 = vld [vmem:[%s3 + $0x18] sm:$0xff]
  %v135 = vld [vmem:[%s3 + $0x20] sm:$0xff]
  %v136 = vld [vmem:[%s3 + $0x28] sm:$0xff]
  %v137 = vld [vmem:[%s3 + $0x30] sm:$0xff]
  %v138 = vld [vmem:[%s3 + $0x38] sm:$0xff]
  %v139 = vld [vmem:[%s4] sm:$0x1]
  %v141 = vlaneseq
  %v142 = vshrl.u32 %v141, 7
  %v143 = vsub.s32 0, %v142
  %v144 = vrot.slane %v139, %v143
  %vm146 = vcmask 523264
  %v148 = vsel %vm146, %v130, 0
  %150 = vmatprep.subr.mxu0 0.0
  %151 = vmatpush1.msra.mxu0 %v131
  %152 = vmatprep.subr.mxu0 0.0
  %153 = vmatpush1.msra.mxu0 %v132
  %154 = vmatprep.subr.mxu0 0.0
  %155 = vmatpush1.msra.mxu0 %v133
  %156 = vmatprep.subr.mxu0 0.0
  %157 = vmatpush1.msra.mxu0 %v134
  %158 = vmatprep.subr.mxu0 0.0
  %159 = vmatpush1.msra.mxu0 %v135
  %160 = vmatprep.subr.mxu0 0.0
  %161 = vmatpush1.msra.mxu0 %v136
  %162 = vmatprep.subr.mxu0 0.0
  %163 = vmatpush1.msra.mxu0 %v137
  %164 = vmatprep.subr.mxu0 0.0
  %165 = vmatpush1.msra.mxu0 %v138
  %166 = vmatprep.subr.mxu0 0.0
  %167 = vmatpush1.msra.mxu0 0.0
  %168 = vmatprep.subr.mxu0 0.0
  %169 = vmatpush1.msra.mxu0 0.0
  %170 = vmatprep.subr.mxu0 0.0
  %171 = vmatpush1.msra.mxu0 0.0
  %172 = vmatprep.subr.mxu0 0.0
  %173 = vmatpush1.msra.mxu0 0.0
  %174 = vmatprep.subr.mxu0 0.0
  %175 = vmatpush1.msra.mxu0 0.0
  %176 = vmatprep.subr.mxu0 0.0
  %177 = vmatpush1.msra.mxu0 0.0
  %178 = vmatprep.subr.mxu0 0.0
  %179 = vmatpush1.msra.mxu0 0.0
  %180 = vmatprep.subr.mxu0 0.0
  %181 = vmatpush1.msra.mxu0 0.0
  %182 = vmatprep.subr.mxu0 0.0
  %183 = vmatpush1.msra.mxu0 0.0
  %184 = vmatprep.subr.mxu0 0.0
  %185 = vmatpush1.msra.mxu0 0.0
  %186 = vmatprep.subr.mxu0 0.0
  %187 = vmatpush1.msra.mxu0 0.0
  %188 = vmatprep.subr.mxu0 0.0
  %189 = vmatpush1.msra.mxu0 0.0
  %190 = vmatprep.subr.mxu0 0.0
  %191 = vmatpush1.msra.mxu0 0.0
  %192 = vmatprep.subr.mxu0 0.0
  %193 = vmatpush1.msra.mxu0 0.0
  %194 = vmatprep.subr.mxu0 0.0
  %195 = vmatpush1.msra.mxu0 0.0
  %196 = vmatprep.subr.mxu0 0.0
  %197 = vmatpush1.msra.mxu0 0.0
  %198 = vmatprep.subr.mxu0 0.0
  %199 = vmatpush1.msra.mxu0 0.0
  %200 = vmatprep.subr.mxu0 0.0
  %201 = vmatpush1.msra.mxu0 0.0
  %202 = vmatprep.subr.mxu0 0.0
  %203 = vmatpush1.msra.mxu0 0.0
  %204 = vmatprep.subr.mxu0 0.0
  %205 = vmatpush1.msra.mxu0 0.0
  %206 = vmatprep.subr.mxu0 0.0
  %207 = vmatpush1.msra.mxu0 0.0
  %208 = vmatprep.subr.mxu0 0.0
  %209 = vmatpush1.msra.mxu0 0.0
  %210 = vmatprep.subr.mxu0 0.0
  %211 = vmatpush1.msra.mxu0 0.0
  %212 = vmatprep.subr.mxu0 0.0
  %213 = vmatpush1.msra.mxu0 0.0
  %214 = vmatprep.mubr.f32.mxu0 0.0
  %215 = vmatmul.mubr.f32.gmra.mrb[0].mxu0 %v148
  %v216 = vpop.f32.mrb[0].mxu0
  %v217 = vadd.f32 %v144, %v216
  %v218 = vpop.f32.mrb[0].mxu0
  %219 = vdwg.mxu0
  %v220 = vtanh.pop %v217
  %v221 = vld [vmem:[%s5] sm:$0xff]
  %v222 = vld [vmem:[%s5 + $0x8] sm:$0xff]
  %v223 = vld [vmem:[%s5 + $0x10] sm:$0xff]
  %v224 = vld [vmem:[%s5 + $0x18] sm:$0xff]
  %v225 = vld [vmem:[%s6] sm:$0x1]
  %v227 = vlaneseq
  %v228 = vshrl.u32 %v227, 7
  %v229 = vsub.s32 0, %v228
  %v230 = vrot.slane %v225, %v229
  %232 = vmatprep.subr.mxu0 0.0
  %233 = vmatpush1.msra.mxu0 %v221
  %234 = vmatprep.subr.mxu0 0.0
  %235 = vmatpush1.msra.mxu0 %v222
  %236 = vmatprep.subr.mxu0 0.0
  %237 = vmatpush1.msra.mxu0 %v223
  %238 = vmatprep.subr.mxu0 0.0
  %239 = vmatpush1.msra.mxu0 %v224
  %240 = vmatprep.subr.mxu0 0.0
  %241 = vmatpush1.msra.mxu0 0.0
  %242 = vmatprep.subr.mxu0 0.0
  %243 = vmatpush1.msra.mxu0 0.0
  %244 = vmatprep.subr.mxu0 0.0
  %245 = vmatpush1.msra.mxu0 0.0
  %246 = vmatprep.subr.mxu0 0.0
  %247 = vmatpush1.msra.mxu0 0.0
  %248 = vmatprep.subr.mxu0 0.0
  %249 = vmatpush1.msra.mxu0 0.0
  %250 = vmatprep.subr.mxu0 0.0
  %251 = vmatpush1.msra.mxu0 0.0
  %252 = vmatprep.subr.mxu0 0.0
  %253 = vmatpush1.msra.mxu0 0.0
  %254 = vmatprep.subr.mxu0 0.0
  %255 = vmatpush1.msra.mxu0 0.0
  %256 = vmatprep.subr.mxu0 0.0
  %257 = vmatpush1.msra.mxu0 0.0
  %258 = vmatprep.subr.mxu0 0.0
  %259 = vmatpush1.msra.mxu0 0.0
  %260 = vmatprep.subr.mxu0 0.0
  %261 = vmatpush1.msra.mxu0 0.0
  %262 = vmatprep.subr.mxu0 0.0
  %263 = vmatpush1.msra.mxu0 0.0
  %264 = vmatprep.subr.mxu0 0.0
  %265 = vmatpush1.msra.mxu0 0.0
  %266 = vmatprep.subr.mxu0 0.0
  %267 = vmatpush1.msra.mxu0 0.0
  %268 = vmatprep.subr.mxu0 0.0
  %269 = vmatpush1.msra.mxu0 0.0
  %270 = vmatprep.subr.mxu0 0.0
  %271 = vmatpush1.msra.mxu0 0.0
  %272 = vmatprep.subr.mxu0 0.0
  %273 = vmatpush1.msra.mxu0 0.0
  %274 = vmatprep.subr.mxu0 0.0
  %275 = vmatpush1.msra.mxu0 0.0
  %276 = vmatprep.subr.mxu0 0.0
  %277 = vmatpush1.msra.mxu0 0.0
  %278 = vmatprep.subr.mxu0 0.0
  %279 = vmatpush1.msra.mxu0 0.0
  %280 = vmatprep.subr.mxu0 0.0
  %281 = vmatpush1.msra.mxu0 0.0
  %282 = vmatprep.subr.mxu0 0.0
  %283 = vmatpush1.msra.mxu0 0.0
  %284 = vmatprep.subr.mxu0 0.0
  %285 = vmatpush1.msra.mxu0 0.0
  %286 = vmatprep.subr.mxu0 0.0
  %287 = vmatpush1.msra.mxu0 0.0
  %288 = vmatprep.subr.mxu0 0.0
  %289 = vmatpush1.msra.mxu0 0.0
  %290 = vmatprep.subr.mxu0 0.0
  %291 = vmatpush1.msra.mxu0 0.0
  %292 = vmatprep.subr.mxu0 0.0
  %293 = vmatpush1.msra.mxu0 0.0
  %294 = vmatprep.subr.mxu0 0.0
  %295 = vmatpush1.msra.mxu0 0.0
  %296 = vmatprep.mubr.f32.mxu0 0.0
  %297 = vmatmul.mubr.f32.gmra.mrb[0].mxu0 %v58
  %v298 = vpop.f32.mrb[0].mxu0
  %v299 = vadd.f32 %v230, %v298
  %v300 = vpop.f32.mrb[0].mxu0
  %301 = vdwg.mxu0
  %v302 = vadd.f32 %v220, %v299
  %v303 = vmax.f32 %v302, 0.0
  %v304 = vld [vmem:[%s7] sm:$0xff]
  %v305 = vld [vmem:[%s7 + $0x8] sm:$0xff]
  %v306 = vld [vmem:[%s7 + $0x10] sm:$0xff]
  %v307 = vld [vmem:[%s7 + $0x18] sm:$0xff]
  %v308 = vld [vmem:[%s7 + $0x20] sm:$0xff]
  %v309 = vld [vmem:[%s7 + $0x28] sm:$0xff]
  %v310 = vld [vmem:[%s7 + $0x30] sm:$0xff]
  %v311 = vld [vmem:[%s7 + $0x38] sm:$0xff]
  %v312 = vld [vmem:[%s8] sm:$0x1]
  %v314 = vlaneseq
  %v315 = vshrl.u32 %v314, 7
  %v316 = vsub.s32 0, %v315
  %v317 = vrot.slane %v312, %v316
  %v320 = vsel %vm146, %v303, 0
  %322 = vmatprep.subr.mxu0 0.0
  %323 = vmatpush1.msra.mxu0 %v304
  %324 = vmatprep.subr.mxu0 0.0
  %325 = vmatpush1.msra.mxu0 %v305
  %326 = vmatprep.subr.mxu0 0.0
  %327 = vmatpush1.msra.mxu0 %v306
  %328 = vmatprep.subr.mxu0 0.0
  %329 = vmatpush1.msra.mxu0 %v307
  %330 = vmatprep.subr.mxu0 0.0
  %331 = vmatpush1.msra.mxu0 %v308
  %332 = vmatprep.subr.mxu0 0.0
  %333 = vmatpush1.msra.mxu0 %v309
  %334 = vmatprep.subr.mxu0 0.0
  %335 = vmatpush1.msra.mxu0 %v310
  %336 = vmatprep.subr.mxu0 0.0
  %337 = vmatpush1.msra.mxu0 %v311
  %338 = vmatprep.subr.mxu0 0.0
  %339 = vmatpush1.msra.mxu0 0.0
  %340 = vmatprep.subr.mxu0 0.0
  %341 = vmatpush1.msra.mxu0 0.0
  %342 = vmatprep.subr.mxu0 0.0
  %343 = vmatpush1.msra.mxu0 0.0
  %344 = vmatprep.subr.mxu0 0.0
  %345 = vmatpush1.msra.mxu0 0.0
  %346 = vmatprep.subr.mxu0 0.0
  %347 = vmatpush1.msra.mxu0 0.0
  %348 = vmatprep.subr.mxu0 0.0
  %349 = vmatpush1.msra.mxu0 0.0
  %350 = vmatprep.subr.mxu0 0.0
  %351 = vmatpush1.msra.mxu0 0.0
  %352 = vmatprep.subr.mxu0 0.0
  %353 = vmatpush1.msra.mxu0 0.0
  %354 = vmatprep.subr.mxu0 0.0
  %355 = vmatpush1.msra.mxu0 0.0
  %356 = vmatprep.subr.mxu0 0.0
  %357 = vmatpush1.msra.mxu0 0.0
  %358 = vmatprep.subr.mxu0 0.0
  %359 = vmatpush1.msra.mxu0 0.0
  %360 = vmatprep.subr.mxu0 0.0
  %361 = vmatpush1.msra.mxu0 0.0
  %362 = vmatprep.subr.mxu0 0.0
  %363 = vmatpush1.msra.mxu0 0.0
  %364 = vmatprep.subr.mxu0 0.0
  %365 = vmatpush1.msra.mxu0 0.0
  %366 = vmatprep.subr.mxu0 0.0
  %367 = vmatpush1.msra.mxu0 0.0
  %368 = vmatprep.subr.mxu0 0.0
  %369 = vmatpush1.msra.mxu0 0.0
  %370 = vmatprep.subr.mxu0 0.0
  %371 = vmatpush1.msra.mxu0 0.0
  %372 = vmatprep.subr.mxu0 0.0
  %373 = vmatpush1.msra.mxu0 0.0
  %374 = vmatprep.subr.mxu0 0.0
  %375 = vmatpush1.msra.mxu0 0.0
  %376 = vmatprep.subr.mxu0 0.0
  %377 = vmatpush1.msra.mxu0 0.0
  %378 = vmatprep.subr.mxu0 0.0
  %379 = vmatpush1.msra.mxu0 0.0
  %380 = vmatprep.subr.mxu0 0.0
  %381 = vmatpush1.msra.mxu0 0.0
  %382 = vmatprep.subr.mxu0 0.0
  %383 = vmatpush1.msra.mxu0 0.0
  %384 = vmatprep.subr.mxu0 0.0
  %385 = vmatpush1.msra.mxu0 0.0
  %386 = vmatprep.mubr.f32.mxu0 0.0
  %387 = vmatmul.mubr.f32.gmra.mrb[0].mxu0 %v320
  %v388 = vpop.f32.mrb[0].mxu0
  %v389 = vadd.f32 %v317, %v388
  %v390 = vpop.f32.mrb[0].mxu0
  %391 = vdwg.mxu0
  %v392 = vtanh.pop %v389
  %v393 = vld [vmem:[%s9] sm:$0xff]
  %v394 = vld [vmem:[%s9 + $0x8] sm:$0xff]
  %v395 = vld [vmem:[%s9 + $0x10] sm:$0xff]
  %v396 = vld [vmem:[%s9 + $0x18] sm:$0xff]
  %v397 = vld [vmem:[%s9 + $0x20] sm:$0xff]
  %v398 = vld [vmem:[%s9 + $0x28] sm:$0xff]
  %v399 = vld [vmem:[%s9 + $0x30] sm:$0xff]
  %v400 = vld [vmem:[%s9 + $0x38] sm:$0xff]
  %v401 = vld [vmem:[%s10] sm:$0x1]
  %v403 = vlaneseq
  %v404 = vshrl.u32 %v403, 7
  %v405 = vsub.s32 0, %v404
  %v406 = vrot.slane %v401, %v405
  %v409 = vsel %vm146, %v392, 0
  %411 = vmatprep.subr.mxu0 0.0
  %412 = vmatpush1.msra.mxu0 %v393
  %413 = vmatprep.subr.mxu0 0.0
  %414 = vmatpush1.msra.mxu0 %v394
  %415 = vmatprep.subr.mxu0 0.0
  %416 = vmatpush1.msra.mxu0 %v395
  %417 = vmatprep.subr.mxu0 0.0
  %418 = vmatpush1.msra.mxu0 %v396
  %419 = vmatprep.subr.mxu0 0.0
  %420 = vmatpush1.msra.mxu0 %v397
  %421 = vmatprep.subr.mxu0 0.0
  %422 = vmatpush1.msra.mxu0 %v398
  %423 = vmatprep.subr.mxu0 0.0
  %424 = vmatpush1.msra.mxu0 %v399
  %425 = vmatprep.subr.mxu0 0.0
  %426 = vmatpush1.msra.mxu0 %v400
  %427 = vmatprep.subr.mxu0 0.0
  %428 = vmatpush1.msra.mxu0 0.0
  %429 = vmatprep.subr.mxu0 0.0
  %430 = vmatpush1.msra.mxu0 0.0
  %431 = vmatprep.subr.mxu0 0.0
  %432 = vmatpush1.msra.mxu0 0.0
  %433 = vmatprep.subr.mxu0 0.0
  %434 = vmatpush1.msra.mxu0 0.0
  %435 = vmatprep.subr.mxu0 0.0
  %436 = vmatpush1.msra.mxu0 0.0
  %437 = vmatprep.subr.mxu0 0.0
  %438 = vmatpush1.msra.mxu0 0.0
  %439 = vmatprep.subr.mxu0 0.0
  %440 = vmatpush1.msra.mxu0 0.0
  %441 = vmatprep.subr.mxu0 0.0
  %442 = vmatpush1.msra.mxu0 0.0
  %443 = vmatprep.subr.mxu0 0.0
  %444 = vmatpush1.msra.mxu0 0.0
  %445 = vmatprep.subr.mxu0 0.0
  %446 = vmatpush1.msra.mxu0 0.0
  %447 = vmatprep.subr.mxu0 0.0
  %448 = vmatpush1.msra.mxu0 0.0
  %449 = vmatprep.subr.mxu0 0.0
  %450 = vmatpush1.msra.mxu0 0.0
  %451 = vmatprep.subr.mxu0 0.0
  %452 = vmatpush1.msra.mxu0 0.0
  %453 = vmatprep.subr.mxu0 0.0
  %454 = vmatpush1.msra.mxu0 0.0
  %455 = vmatprep.subr.mxu0 0.0
  %456 = vmatpush1.msra.mxu0 0.0
  %457 = vmatprep.subr.mxu0 0.0
  %458 = vmatpush1.msra.mxu0 0.0
  %459 = vmatprep.subr.mxu0 0.0
  %460 = vmatpush1.msra.mxu0 0.0
  %461 = vmatprep.subr.mxu0 0.0
  %462 = vmatpush1.msra.mxu0 0.0
  %463 = vmatprep.subr.mxu0 0.0
  %464 = vmatpush1.msra.mxu0 0.0
  %465 = vmatprep.subr.mxu0 0.0
  %466 = vmatpush1.msra.mxu0 0.0
  %467 = vmatprep.subr.mxu0 0.0
  %468 = vmatpush1.msra.mxu0 0.0
  %469 = vmatprep.subr.mxu0 0.0
  %470 = vmatpush1.msra.mxu0 0.0
  %471 = vmatprep.subr.mxu0 0.0
  %472 = vmatpush1.msra.mxu0 0.0
  %473 = vmatprep.subr.mxu0 0.0
  %474 = vmatpush1.msra.mxu0 0.0
  %475 = vmatprep.mubr.f32.mxu0 0.0
  %476 = vmatmul.mubr.f32.gmra.mrb[0].mxu0 %v409
  %v477 = vpop.f32.mrb[0].mxu0
  %v478 = vadd.f32 %v406, %v477
  %v479 = vpop.f32.mrb[0].mxu0
  %480 = vdwg.mxu0
  %v481 = vtanh.pop %v478
  %v482 = vld [vmem:[%s11] sm:$0xff]
  %v483 = vld [vmem:[%s11 + $0x8] sm:$0xff]
  %v484 = vld [vmem:[%s11 + $0x10] sm:$0xff]
  %v485 = vld [vmem:[%s11 + $0x18] sm:$0xff]
  %v486 = vld [vmem:[%s11 + $0x20] sm:$0xff]
  %v487 = vld [vmem:[%s11 + $0x28] sm:$0xff]
  %v488 = vld [vmem:[%s11 + $0x30] sm:$0xff]
  %v489 = vld [vmem:[%s11 + $0x38] sm:$0xff]
  %v490 = vld [vmem:[%s12] sm:$0x1]
  %v492 = vlaneseq
  %v493 = vshrl.u32 %v492, 7
  %v494 = vsub.s32 0, %v493
  %v495 = vrot.slane %v490, %v494
  %497 = vmatprep.subr.mxu0 0.0
  %498 = vmatpush1.msra.mxu0 %v482
  %499 = vmatprep.subr.mxu0 0.0
  %500 = vmatpush1.msra.mxu0 %v483
  %501 = vmatprep.subr.mxu0 0.0
  %502 = vmatpush1.msra.mxu0 %v484
  %503 = vmatprep.subr.mxu0 0.0
  %504 = vmatpush1.msra.mxu0 %v485
  %505 = vmatprep.subr.mxu0 0.0
  %506 = vmatpush1.msra.mxu0 %v486
  %507 = vmatprep.subr.mxu0 0.0
  %508 = vmatpush1.msra.mxu0 %v487
  %509 = vmatprep.subr.mxu0 0.0
  %510 = vmatpush1.msra.mxu0 %v488
  %511 = vmatprep.subr.mxu0 0.0
  %512 = vmatpush1.msra.mxu0 %v489
  %513 = vmatprep.subr.mxu0 0.0
  %514 = vmatpush1.msra.mxu0 0.0
  %515 = vmatprep.subr.mxu0 0.0
  %516 = vmatpush1.msra.mxu0 0.0
  %517 = vmatprep.subr.mxu0 0.0
  %518 = vmatpush1.msra.mxu0 0.0
  %519 = vmatprep.subr.mxu0 0.0
  %520 = vmatpush1.msra.mxu0 0.0
  %521 = vmatprep.subr.mxu0 0.0
  %522 = vmatpush1.msra.mxu0 0.0
  %523 = vmatprep.subr.mxu0 0.0
  %524 = vmatpush1.msra.mxu0 0.0
  %525 = vmatprep.subr.mxu0 0.0
  %526 = vmatpush1.msra.mxu0 0.0
  %527 = vmatprep.subr.mxu0 0.0
  %528 = vmatpush1.msra.mxu0 0.0
  %529 = vmatprep.subr.mxu0 0.0
  %530 = vmatpush1.msra.mxu0 0.0
  %531 = vmatprep.subr.mxu0 0.0
  %532 = vmatpush1.msra.mxu0 0.0
  %533 = vmatprep.subr.mxu0 0.0
  %534 = vmatpush1.msra.mxu0 0.0
  %535 = vmatprep.subr.mxu0 0.0
  %536 = vmatpush1.msra.mxu0 0.0
  %537 = vmatprep.subr.mxu0 0.0
  %538 = vmatpush1.msra.mxu0 0.0
  %539 = vmatprep.subr.mxu0 0.0
  %540 = vmatpush1.msra.mxu0 0.0
  %541 = vmatprep.subr.mxu0 0.0
  %542 = vmatpush1.msra.mxu0 0.0
  %543 = vmatprep.subr.mxu0 0.0
  %544 = vmatpush1.msra.mxu0 0.0
  %545 = vmatprep.subr.mxu0 0.0
  %546 = vmatpush1.msra.mxu0 0.0
  %547 = vmatprep.subr.mxu0 0.0
  %548 = vmatpush1.msra.mxu0 0.0
  %549 = vmatprep.subr.mxu0 0.0
  %550 = vmatpush1.msra.mxu0 0.0
  %551 = vmatprep.subr.mxu0 0.0
  %552 = vmatpush1.msra.mxu0 0.0
  %553 = vmatprep.subr.mxu0 0.0
  %554 = vmatpush1.msra.mxu0 0.0
  %555 = vmatprep.subr.mxu0 0.0
  %556 = vmatpush1.msra.mxu0 0.0
  %557 = vmatprep.subr.mxu0 0.0
  %558 = vmatpush1.msra.mxu0 0.0
  %559 = vmatprep.subr.mxu0 0.0
  %560 = vmatpush1.msra.mxu0 0.0
  %561 = vmatprep.mubr.f32.mxu0 0.0
  %562 = vmatmul.mubr.f32.gmra.mrb[0].mxu0 %v320
  %v563 = vpop.f32.mrb[0].mxu0
  %v564 = vadd.f32 %v495, %v563
  %v565 = vpop.f32.mrb[0].mxu0
  %566 = vdwg.mxu0
  %v567 = vadd.f32 %v481, %v564
  %v568 = vmax.f32 %v567, 0.0
  %569 = vst.msk [vmem:[%s13] sm:$0xff] %vm146, %v568
  // Predicated region
  $region54: #{gtcn_forward.2} parent=0 // pred_check
    _
  $region55: #{gtcn_forward.2} parent=0 // pred_check_branch
    %571 = sbr.rel (0) target = $region57
  $region56: #{gtcn_forward.2} parent=0 // pred_region
    _
  $region57: #{gtcn_forward.2} parent=0 // pred_fallthru
    _
  // Predicated region
  $region58: #{gtcn_forward.2} parent=0 // pred_check
    _
  $region59: #{gtcn_forward.2} parent=0 // pred_check_branch
    %573 = sbr.rel (0) target = $region61
  $region60: #{gtcn_forward.2} parent=0 // pred_region
    _
  $region61: #{gtcn_forward.2} parent=0 // pred_fallthru
    _

</llo_original>
